<compile_context>
chip_gen: v7x
topology: tpu7x:2x2x1
jax: 0.10.0
libtpu: 0.0.40
codegen_flags: <defaults>
</compile_context>

<pallas_src>
import functools

import jax
import jax.numpy as jnp
from jax.experimental import pallas as pl
from jax.experimental.pallas import tpu as pltpu


def _round_up(x, m):
    return (x + m - 1) // m * m


def _cloud_encoder_kernel(idx_ref, table_hbm, mask_ref, out_ref, slab_ref, sem,
                          *, block_rows):
    """One grid step: gather `block_rows` embedding rows by manual DMA (all copies
    in flight at once), then L2-normalize every D-wide segment of the slab.

    idx_ref   : SMEM (B_pad,) int32        -- scalar-prefetched flat indices
    table_hbm : ANY  (nentity, V)          -- raw HBM ref, V = n_vec * D
    mask_ref  : VMEM (V, V) float32        -- block-diagonal segment mask (resident)
    out_ref   : VMEM (block_rows, V)       -- lane-dense output block
    slab_ref  : VMEM (block_rows, V)       -- gather landing buffer (scratch)
    sem       : DMA semaphore array, shape (1,)
    """
    i = pl.program_id(0)
    base = i * block_rows

    # ---- gather: issue every row DMA first (latency overlap), then wait all ----
    @pl.loop(0, block_rows)
    def _issue(b):
        pltpu.make_async_copy(
            table_hbm.at[idx_ref[base + b]],   # (V,) row in HBM
            slab_ref.at[b],                    # (V,) row in VMEM
            sem.at[0],
        ).start()

    @pl.loop(0, block_rows)
    def _wait(b):
        # Wait amount is determined by the dst view; src here is a placeholder.
        pltpu.make_async_copy(table_hbm.at[0], slab_ref.at[b], sem.at[0]).wait()

    # ---- normalize: per-(D)-segment L2 norm, lane-dense throughout --------------
    e = slab_ref[...].astype(jnp.float32)                       # (Bt, V)
    sq = e * e
    # Block-diagonal 0/1 mask broadcasts each segment's sum back onto every lane of
    # that segment: ss[b, j] = sum_{k : k//D == j//D} sq[b, k].
    ss = jnp.dot(sq, mask_ref[...],
                 precision=jax.lax.Precision.HIGHEST,
                 preferred_element_type=jnp.float32)            # (Bt, V)
    # NOTE: matches PyTorch semantics -- an all-zero row produces inf/nan.
    out_ref[...] = (e * jax.lax.rsqrt(ss)).astype(out_ref.dtype)


def cloud_encoder_forward(table, indices, *, n_vec, embedding_dim):
    """table: (nentity, n_vec * embedding_dim) embedding weights.
    indices: int array of arbitrary shape.
    Returns (prod(indices.shape), n_vec, embedding_dim), L2-normalized on last dim."""
    nentity = table.shape[0]
    D = embedding_dim
    V = n_vec * D
    assert table.shape[1] == V

    table2d = table.reshape(nentity, V)
    flat_idx = indices.reshape(-1).astype(jnp.int32)
    B = flat_idx.shape[0]

    # Rows per grid step: amortize per-step overhead while keeping
    # slab + double-buffered output block within a few MiB (v7x scoped VMEM budget).
    vmem_budget = 4 << 20                                   # slab + 2x out block
    rows_budget = max(8, ((vmem_budget // (3 * V * 4)) // 8) * 8)
    Bt = min(512, rows_budget, _round_up(B, 8))
    B_pad = _round_up(B, Bt)
    idx_pad = jnp.zeros((B_pad,), jnp.int32).at[:B].set(flat_idx)  # pad with valid idx 0

    # Block-diagonal 0/1 segment mask used to broadcast per-segment sums on the MXU.
    seg = jnp.arange(V, dtype=jnp.int32) // D
    mask = (seg[:, None] == seg[None, :]).astype(jnp.float32)      # (V, V)
    # TODO(synk): for very large n_vec*D the (V, V) mask gets big; switch to an
    # in-kernel segmented reduction in that regime.

    grid = (B_pad // Bt,)
    kernel = functools.partial(_cloud_encoder_kernel, block_rows=Bt)

    out2d = pl.pallas_call(
        kernel,
        out_shape=jax.ShapeDtypeStruct((B_pad, V), table.dtype),
        grid_spec=pltpu.PrefetchScalarGridSpec(
            num_scalar_prefetch=1,
            grid=grid,
            in_specs=[
                pl.BlockSpec(memory_space=pl.ANY),                # table stays in HBM
                pl.BlockSpec((V, V), lambda i, idx: (0, 0)),      # mask, VMEM-resident
            ],
            out_specs=pl.BlockSpec((Bt, V), lambda i, idx: (i, 0)),
            scratch_shapes=[
                pltpu.VMEM((Bt, V), table.dtype),                 # gather slab
                pltpu.SemaphoreType.DMA((1,)),
            ],
        ),
        compiler_params=pltpu.CompilerParams(
            dimension_semantics=("parallel",),
        ),
        cost_estimate=pl.CostEstimate(
            flops=3 * B_pad * V,
            transcendentals=B_pad * n_vec,
            bytes_accessed=2 * B_pad * V * 4 + V * V * 4 + B_pad * 4,
        ),
    )(idx_pad, table2d, mask)

    # Lane-dense (B_pad, V) store in the kernel; metadata-only reshape here.
    return out2d[:B].reshape(B, n_vec, D)


def _reference(table, indices, *, n_vec, embedding_dim):
    embeds = jnp.take(table, indices.reshape(-1), axis=0)
    embeds = embeds.reshape(-1, n_vec, embedding_dim)
    norm = jnp.sqrt(jnp.sum(embeds * embeds, axis=2, keepdims=True))
    return embeds / norm


if __name__ == "__main__":
    # Small, deterministic synthetic setup.
    nentity = 16
    embedding_dim = 32
    n_vec = 8
    key = jax.random.PRNGKey(0)
    k_tab, k_idx = jax.random.split(key)

    # Deterministic "parameters" (stand-in for nn.Embedding weights).
    table = jax.random.normal(k_tab, (nentity, embedding_dim * n_vec), dtype=jnp.float32)
    # indices of shape (2, 4) -> flattened batch of 8
    indices = jax.random.randint(k_idx, (2, 4), 0, nentity, dtype=jnp.int32)

    out = cloud_encoder_forward(table, indices, n_vec=n_vec, embedding_dim=embedding_dim)
    out = jax.block_until_ready(out)

    ref = _reference(table, indices, n_vec=n_vec, embedding_dim=embedding_dim)
    assert out.shape == (indices.size, n_vec, embedding_dim), out.shape
    assert jnp.allclose(out, ref, atol=1e-5, rtol=1e-5), "mismatch vs reference"

    print("KERNEL_OK")
</pallas_src>

<mosaic_0001>
module attributes {stable_mosaic.version = 11 : i64} {
  func.func @_cloud_encoder_kernel(%arg0: i32, %arg1: memref<8xi32, #tpu.memory_space<smem>>, %arg2: memref<16x256xf32, #tpu.memory_space<any>>, %arg3: memref<256x256xf32, #tpu.memory_space<vmem>>, %arg4: memref<8x256xf32, #tpu.memory_space<vmem>>, %arg5: memref<8x256xf32, #tpu.memory_space<vmem>>, %arg6: memref<1x!tpu.dma_semaphore, #tpu.memory_space<semaphore_mem>>) attributes {dimension_semantics = [#tpu.dimension_semantics<parallel>], iteration_bounds = array<i64: 1>, scalar_prefetch = 1 : i64, scratch_operands = 2 : i64, tpu.core_type = #tpu.core_type<tc>, window_params = [{}, {pipeline_mode = #tpu.pipeline_mode<synchronous>, transform_indices = @transform_1, window_bounds = array<i64: 256, 256>}, {transform_indices = @transform_2, window_bounds = array<i64: 8, 256>}]} {
    %c8_i32 = arith.constant 8 : i32
    %0 = arith.muli %arg0, %c8_i32 : i32
    %c0_i32 = arith.constant 0 : i32
    %c8_i32_0 = arith.constant 8 : i32
    %1 = arith.addi %c0_i32, %c8_i32_0 : i32
    %c1_i32 = arith.constant 1 : i32
    scf.for %arg7 = %c0_i32 to %1 step %c1_i32  : i32 {
      %c1_i32_11 = arith.constant 1 : i32
      %10 = arith.muli %arg7, %c1_i32_11 : i32
      %c0_i32_12 = arith.constant 0 : i32
      %11 = arith.addi %c0_i32_12, %10 : i32
      %12 = arith.addi %0, %11 : i32
      %13 = arith.index_cast %12 : i32 to index
      %14 = memref.load %arg1[%13] : memref<8xi32, #tpu.memory_space<smem>>
      %c0_i32_13 = arith.constant 0 : i32
      %c0_i32_14 = arith.constant 0 : i32
      %15 = tpu.memref_slice %arg2[%14, %c0_i32_14] : memref<16x256xf32, #tpu.memory_space<any>> -> memref<1x256xf32, #tpu.memory_space<any>>
      %16 = tpu.memref_squeeze %15 : memref<1x256xf32, #tpu.memory_space<any>> -> memref<256xf32, #tpu.memory_space<any>>
      %c0_i32_15 = arith.constant 0 : i32
      %17 = tpu.memref_slice %arg5[%11, %c0_i32_15] : memref<8x256xf32, #tpu.memory_space<vmem>> -> memref<1x256xf32, #tpu.memory_space<vmem>>
      %18 = tpu.memref_squeeze %17 : memref<1x256xf32, #tpu.memory_space<vmem>> -> memref<256xf32, #tpu.memory_space<vmem>>
      %19 = tpu.memref_slice %arg6[%c0_i32_13] : memref<1x!tpu.dma_semaphore, #tpu.memory_space<semaphore_mem>> -> memref<1x!tpu.dma_semaphore, #tpu.memory_space<semaphore_mem>>
      %20 = tpu.memref_squeeze %19 : memref<1x!tpu.dma_semaphore, #tpu.memory_space<semaphore_mem>> -> memref<!tpu.dma_semaphore, #tpu.memory_space<semaphore_mem>>
      tpu.enqueue_dma source(%16 : memref<256xf32, #tpu.memory_space<any>>) target(%18 : memref<256xf32, #tpu.memory_space<vmem>>) target_semaphore(%20 : memref<!tpu.dma_semaphore, #tpu.memory_space<semaphore_mem>>)
    }
    %c8_i32_1 = arith.constant 8 : i32
    %c0_i32_2 = arith.constant 0 : i32
    %c8_i32_3 = arith.constant 8 : i32
    %2 = arith.addi %c0_i32_2, %c8_i32_3 : i32
    %c1_i32_4 = arith.constant 1 : i32
    scf.for %arg7 = %c0_i32_2 to %2 step %c1_i32_4  : i32 {
      %c1_i32_11 = arith.constant 1 : i32
      %10 = arith.muli %arg7, %c1_i32_11 : i32
      %c0_i32_12 = arith.constant 0 : i32
      %11 = arith.addi %c0_i32_12, %10 : i32
      %c0_i32_13 = arith.constant 0 : i32
      %c0_i32_14 = arith.constant 0 : i32
      %c0_i32_15 = arith.constant 0 : i32
      %12 = tpu.memref_slice %arg2[%c0_i32_13, %c0_i32_15] : memref<16x256xf32, #tpu.memory_space<any>> -> memref<1x256xf32, #tpu.memory_space<any>>
      %13 = tpu.memref_squeeze %12 : memref<1x256xf32, #tpu.memory_space<any>> -> memref<256xf32, #tpu.memory_space<any>>
      %c0_i32_16 = arith.constant 0 : i32
      %14 = tpu.memref_slice %arg5[%11, %c0_i32_16] : memref<8x256xf32, #tpu.memory_space<vmem>> -> memref<1x256xf32, #tpu.memory_space<vmem>>
      %15 = tpu.memref_squeeze %14 : memref<1x256xf32, #tpu.memory_space<vmem>> -> memref<256xf32, #tpu.memory_space<vmem>>
      %16 = tpu.memref_slice %arg6[%c0_i32_14] : memref<1x!tpu.dma_semaphore, #tpu.memory_space<semaphore_mem>> -> memref<1x!tpu.dma_semaphore, #tpu.memory_space<semaphore_mem>>
      %17 = tpu.memref_squeeze %16 : memref<1x!tpu.dma_semaphore, #tpu.memory_space<semaphore_mem>> -> memref<!tpu.dma_semaphore, #tpu.memory_space<semaphore_mem>>
      tpu.wait_dma2 semaphore(%17 : memref<!tpu.dma_semaphore, #tpu.memory_space<semaphore_mem>>) src(%13 : memref<256xf32, #tpu.memory_space<any>>) dst(%15 : memref<256xf32, #tpu.memory_space<vmem>>)
    }
    %c8_i32_5 = arith.constant 8 : i32
    %c0 = arith.constant 0 : index
    %c0_6 = arith.constant 0 : index
    %3 = vector.load %arg5[%c0, %c0_6] : memref<8x256xf32, #tpu.memory_space<vmem>>, vector<8x256xf32>
    %4 = arith.mulf %3, %3 : vector<8x256xf32>
    %c0_7 = arith.constant 0 : index
    %c0_8 = arith.constant 0 : index
    %5 = vector.load %arg3[%c0_7, %c0_8] : memref<256x256xf32, #tpu.memory_space<vmem>>, vector<256x256xf32>
    %cst = arith.constant dense<0.000000e+00> : vector<8x256xf32>
    %6 = tpu.matmul %4, %5, %cst {dimension_numbers = #tpu.dot_dimension_numbers<[1], [0], [0], [1], [0, 0, 1, 1], [], []>, precision = #tpu.contract_precision<fp32>} : vector<8x256xf32>, vector<256x256xf32>, vector<8x256xf32> -> vector<8x256xf32>
    %7 = math.rsqrt %6 : vector<8x256xf32>
    %8 = arith.mulf %3, %7 : vector<8x256xf32>
    %c0_9 = arith.constant 0 : index
    %c0_10 = arith.constant 0 : index
    %9 = vector.load %arg4[%c0_9, %c0_10] : memref<8x256xf32, #tpu.memory_space<vmem>>, vector<8x256xf32>
    tpu.vector_store %arg4[%c0_9, %c0_10], %8 {strides = array<i32>} : memref<8x256xf32, #tpu.memory_space<vmem>>, vector<8x256xf32>,
    return
  }
  func.func @transform_1(%arg0: i32, %arg1: memref<8xi32, #tpu.memory_space<smem>>) -> (i32, i32) {
    %c0_i32 = arith.constant 0 : i32
    %c0_i32_0 = arith.constant 0 : i32
    %c0_i32_1 = arith.constant 0 : i32
    return %c0_i32, %c0_i32_0 : i32, i32
  }
  func.func @transform_2(%arg0: i32, %arg1: memref<8xi32, #tpu.memory_space<smem>>) -> (i32, i32) {
    %c0_i32 = arith.constant 0 : i32
    %c0_i32_0 = arith.constant 0 : i32
    return %arg0, %c0_i32 : i32, i32
  }
}

</mosaic_0001>

<llo_original>
// kernel: tpu_custom_call.1
$region0: #{tpu_custom_call.1}
  #allocation0 [shape = 'u32[]', space=smem, size = 0x4, offset = 0x4, fixed_abs, tag = 'smem constant byte address 0x4 - core index']
  #allocation1 [shape = 'u32[144,128]{1,0:T(1,128)}', space=vmem, size = 0x12000, scoped, tag = 'internal scratch']
  #allocation2 [shape = 'f32[8,256]{1,0:T(8,128)}', space=vmem, size = 0x2000, scoped, tag = 'scratch operand']
  #allocation3 [shape = 's32[1]{0}', space=sflag, size = 0x4, scoped, tag = 'scratch operand']
  #allocation4 [shape = 's32[1]{0}', space=sflag, size = 0x4, scoped, tag = 'scoped memory for tpu_custom_call.1']
  #allocation5 [shape = 'u8[512]{0}', space=smem, size = 0x200, scoped, tag = 'prefetched SMEM operand 0']
  #allocation10 [shape = 's32[]', space=sflag, size = 0x4, offset = 0, fixed_abs, tag = 'sflag constant byte address 0x0 - dummy sync flag']
  %s0 = inlined_call_operand.hbm [shape: s32[8], index: 0, kind: input, shape index: {}]
  %s1 = inlined_call_operand.hbm [shape: f32[16,256], index: 1, kind: input, shape index: {}]
  %s2 = inlined_call_operand.hbm [shape: f32[256,256], index: 2, kind: input, shape index: {}]
  %s3 = inlined_call_operand.hbm [shape: f32[8,256], index: 3, kind: output, shape index: {}]
  %s4 = sld [smem:[#allocation0]]
  $region32: #{tpu_custom_call.1} parent=0
    _
  %s6 = ssub.s32 1, %s4
  %s7 = scalar_select 0, %s6, %s4
  %9 = dma.hbm_to_smem %s0, 16, [#allocation5], [#allocation4]
  %10 = dma.done [#allocation4], 16
  %11 = sfence
  $region1: #{tpu_custom_call.1} parent=0
    #allocation6 [shape = 'u8[262144]{0}', space=vmem, size = 0x40000, scoped, tag = 'input window, operand 2, single buffered']
    #allocation7 [shape = 's32[1]{0}', space=sflag, size = 0x4, scoped, tag = 'scoped memory for tpu_custom_call.1']
    #allocation8 [shape = 's32[1]{0}', space=sflag, size = 0x4, scoped, tag = 'scoped memory for tpu_custom_call.1']
    #allocation9 [shape = 'u8[8192]{0}', space=vmem, size = 0x2000, scoped, tag = 'output window, operand 0, single buffered']
    %12 = vsyncpa [#allocation7], 0
    %13 = vsyncpa [#allocation8], 0
    // Predicated region
    $region2: #{tpu_custom_call.1} parent=1 // pred_check
      _
    $region3: #{tpu_custom_call.1} parent=1 // pred_check_branch
      %15 = sbr.rel (0) target = $region5
    $region4: #{tpu_custom_call.1} parent=1 // pred_region
      %s17 = ssub.s32 8192, 8192
      %18 = vsyncadd [#allocation7], %s17
      %s19 = sshll.u32 [#allocation6], 4
      %s20 = int_to_ptr.vmem [resolvable:$true] %s19
      %25 = dma.hbm_to_vmem [thread:$0]  %s2, 8192, %s20, [#allocation7], 256, 256, 16
    $region5: #{tpu_custom_call.1} parent=1 // pred_fallthru
      _
    // Predicated region
    $region6: #{tpu_custom_call.1} parent=1 // pred_check
      _
    $region7: #{tpu_custom_call.1} parent=1 // pred_check_branch
      %27 = sbr.rel (0) target = $region9
    $region8: #{tpu_custom_call.1} parent=1 // pred_region
      %28 = dma.done [#allocation7], 8192
    $region9: #{tpu_custom_call.1} parent=1 // pred_fallthru
      _
    %s29 = smul.u32 0, 8
    loop: start=0, step=1, limit=8
    $region10: #{tpu_custom_call.1} parent=1 // loop_pre_header
      _
    $region11: #{tpu_custom_call.1} parent=1 // loop_header
      %s31 = sphi 0, %s35
      %p32 = scmp.ge.s32.totalorder %s31, 8
    $region12: #{tpu_custom_call.1} parent=1 // loop_header_branch
      %34 = sbr.rel (%p32) target = $region16
    $region13: #{tpu_custom_call.1} parent=1 // loop_body
      %s36 = sadd.s32 %s29, %s31
      %s37 = sld [smem:[#allocation5 + %s36]]
      %s38 = sshrl.u32 %s37, 3
      %s39 = sand.u32 %s37, 7
      %s40 = smul.u32 %s38, 16
      %s41 = sadd.s32 %s39, %s40
      %s42 = smul.addr %s41, 16
      %s43 = scalar_lea.hbm %s1, %s42
      %s44 = sshrl.u32 %s31, 3
      %s45 = sand.u32 %s31, 7
      %s46 = smul.u32 %s44, 16
      %s47 = sadd.s32 %s45, %s46
      %s48 = scalar_lea.vmem [#allocation2], %s47
      %s50 = sshll.u32 %s48, 4
      %s51 = int_to_ptr.vmem [resolvable:$true] %s50
      %53 = dma.hbm_to_vmem [thread:$0]  %s43, 32, %s51, [#allocation3], 128, 128, 1
    $region14: #{tpu_custom_call.1} parent=1 // loop_footer
      %s35 = sadd.s32 1, %s31
    $region15: #{tpu_custom_call.1} parent=1 // loop_footer_branch
      %30 = sbr.rel target = $region11
    $region16: #{tpu_custom_call.1} parent=1 // loop_exit
      _
    loop: start=0, step=1, limit=8
    $region17: #{tpu_custom_call.1} parent=1 // loop_pre_header
      _
    $region18: #{tpu_custom_call.1} parent=1 // loop_header
      %s55 = sphi 0, %s59
      %p56 = scmp.ge.s32.totalorder %s55, 8
    $region19: #{tpu_custom_call.1} parent=1 // loop_header_branch
      %58 = sbr.rel (%p56) target = $region23
    $region20: #{tpu_custom_call.1} parent=1 // loop_body
      %61 = dma.done [#allocation3], 32
    $region21: #{tpu_custom_call.1} parent=1 // loop_footer
      %s59 = sadd.s32 1, %s55
    $region22: #{tpu_custom_call.1} parent=1 // loop_footer_branch
      %54 = sbr.rel target = $region18
    $region23: #{tpu_custom_call.1} parent=1 // loop_exit
      _
    %v62 = vld [vmem:[#allocation2] sm:$0xff]
    %v63 = vld [vmem:[#allocation2 + $0x8] sm:$0xff]
    %v64 = vmul.f32 %v62, %v62
    %v65 = vmul.f32 %v63, %v63
    %v66 = vld [vmem:[#allocation6] sm:$0xff]
    %v67 = vld [vmem:[#allocation6 + $0x8] sm:$0xff]
    %v68 = vld [vmem:[#allocation6 + $0x10] sm:$0xff]
    %v69 = vld [vmem:[#allocation6 + $0x18] sm:$0xff]
    %v70 = vld [vmem:[#allocation6 + $0x20] sm:$0xff]
    %v71 = vld [vmem:[#allocation6 + $0x28] sm:$0xff]
    %v72 = vld [vmem:[#allocation6 + $0x30] sm:$0xff]
    %v73 = vld [vmem:[#allocation6 + $0x38] sm:$0xff]
    %v74 = vld [vmem:[#allocation6 + $0x40] sm:$0xff]
    %v75 = vld [vmem:[#allocation6 + $0x48] sm:$0xff]
    %v76 = vld [vmem:[#allocation6 + $0x50] sm:$0xff]
    %v77 = vld [vmem:[#allocation6 + $0x58] sm:$0xff]
    %v78 = vld [vmem:[#allocation6 + $0x60] sm:$0xff]
    %v79 = vld [vmem:[#allocation6 + $0x68] sm:$0xff]
    %v80 = vld [vmem:[#allocation6 + $0x70] sm:$0xff]
    %v81 = vld [vmem:[#allocation6 + $0x78] sm:$0xff]
    %v82 = vld [vmem:[#allocation6 + $0x80] sm:$0xff]
    %v83 = vld [vmem:[#allocation6 + $0x88] sm:$0xff]
    %v84 = vld [vmem:[#allocation6 + $0x90] sm:$0xff]
    %v85 = vld [vmem:[#allocation6 + $0x98] sm:$0xff]
    %v86 = vld [vmem:[#allocation6 + $0xa0] sm:$0xff]
    %v87 = vld [vmem:[#allocation6 + $0xa8] sm:$0xff]
    %v88 = vld [vmem:[#allocation6 + $0xb0] sm:$0xff]
    %v89 = vld [vmem:[#allocation6 + $0xb8] sm:$0xff]
    %v90 = vld [vmem:[#allocation6 + $0xc0] sm:$0xff]
    %v91 = vld [vmem:[#allocation6 + $0xc8] sm:$0xff]
    %v92 = vld [vmem:[#allocation6 + $0xd0] sm:$0xff]
    %v93 = vld [vmem:[#allocation6 + $0xd8] sm:$0xff]
    %v94 = vld [vmem:[#allocation6 + $0xe0] sm:$0xff]
    %v95 = vld [vmem:[#allocation6 + $0xe8] sm:$0xff]
    %v96 = vld [vmem:[#allocation6 + $0xf0] sm:$0xff]
    %v97 = vld [vmem:[#allocation6 + $0xf8] sm:$0xff]
    %v98 = vld [vmem:[#allocation6 + $0x100] sm:$0xff]
    %v99 = vld [vmem:[#allocation6 + $0x108] sm:$0xff]
    %v100 = vld [vmem:[#allocation6 + $0x110] sm:$0xff]
    %v101 = vld [vmem:[#allocation6 + $0x118] sm:$0xff]
    %v102 = vld [vmem:[#allocation6 + $0x120] sm:$0xff]
    %v103 = vld [vmem:[#allocation6 + $0x128] sm:$0xff]
    %v104 = vld [vmem:[#allocation6 + $0x130] sm:$0xff]
    %v105 = vld [vmem:[#allocation6 + $0x138] sm:$0xff]
    %v106 = vld [vmem:[#allocation6 + $0x140] sm:$0xff]
    %v107 = vld [vmem:[#allocation6 + $0x148] sm:$0xff]
    %v108 = vld [vmem:[#allocation6 + $0x150] sm:$0xff]
    %v109 = vld [vmem:[#allocation6 + $0x158] sm:$0xff]
    %v110 = vld [vmem:[#allocation6 + $0x160] sm:$0xff]
    %v111 = vld [vmem:[#allocation6 + $0x168] sm:$0xff]
    %v112 = vld [vmem:[#allocation6 + $0x170] sm:$0xff]
    %v113 = vld [vmem:[#allocation6 + $0x178] sm:$0xff]
    %v114 = vld [vmem:[#allocation6 + $0x180] sm:$0xff]
    %v115 = vld [vmem:[#allocation6 + $0x188] sm:$0xff]
    %v116 = vld [vmem:[#allocation6 + $0x190] sm:$0xff]
    %v117 = vld [vmem:[#allocation6 + $0x198] sm:$0xff]
    %v118 = vld [vmem:[#allocation6 + $0x1a0] sm:$0xff]
    %v119 = vld [vmem:[#allocation6 + $0x1a8] sm:$0xff]
    %v120 = vld [vmem:[#allocation6 + $0x1b0] sm:$0xff]
    %v121 = vld [vmem:[#allocation6 + $0x1b8] sm:$0xff]
    %v122 = vld [vmem:[#allocation6 + $0x1c0] sm:$0xff]
    %v123 = vld [vmem:[#allocation6 + $0x1c8] sm:$0xff]
    %v124 = vld [vmem:[#allocation6 + $0x1d0] sm:$0xff]
    %v125 = vld [vmem:[#allocation6 + $0x1d8] sm:$0xff]
    %v126 = vld [vmem:[#allocation6 + $0x1e0] sm:$0xff]
    %v127 = vld [vmem:[#allocation6 + $0x1e8] sm:$0xff]
    %v128 = vld [vmem:[#allocation6 + $0x1f0] sm:$0xff]
    %v129 = vld [vmem:[#allocation6 + $0x1f8] sm:$0xff]
    %v130 = vand.u32 %v67, 4294901760
    %131 = vmatprep.subr.mxu0 %v130
    %v132 = vand.u32 %v66, 4294901760
    %133 = vmatpush1.msra.mxu0 %v132
    %v134 = vand.u32 %v69, 4294901760
    %135 = vmatprep.subr.mxu0 %v134
    %v136 = vand.u32 %v68, 4294901760
    %137 = vmatpush1.msra.mxu0 %v136
    %v138 = vand.u32 %v71, 4294901760
    %139 = vmatprep.subr.mxu0 %v138
    %v140 = vand.u32 %v70, 4294901760
    %141 = vmatpush1.msra.mxu0 %v140
    %v142 = vand.u32 %v73, 4294901760
    %143 = vmatprep.subr.mxu0 %v142
    %v144 = vand.u32 %v72, 4294901760
    %145 = vmatpush1.msra.mxu0 %v144
    %v146 = vand.u32 %v75, 4294901760
    %147 = vmatprep.subr.mxu0 %v146
    %v148 = vand.u32 %v74, 4294901760
    %149 = vmatpush1.msra.mxu0 %v148
    %v150 = vand.u32 %v77, 4294901760
    %151 = vmatprep.subr.mxu0 %v150
    %v152 = vand.u32 %v76, 4294901760
    %153 = vmatpush1.msra.mxu0 %v152
    %v154 = vand.u32 %v79, 4294901760
    %155 = vmatprep.subr.mxu0 %v154
    %v156 = vand.u32 %v78, 4294901760
    %157 = vmatpush1.msra.mxu0 %v156
    %v158 = vand.u32 %v81, 4294901760
    %159 = vmatprep.subr.mxu0 %v158
    %v160 = vand.u32 %v80, 4294901760
    %161 = vmatpush1.msra.mxu0 %v160
    %v162 = vand.u32 %v83, 4294901760
    %163 = vmatprep.subr.mxu0 %v162
    %v164 = vand.u32 %v82, 4294901760
    %165 = vmatpush1.msra.mxu0 %v164
    %v166 = vand.u32 %v85, 4294901760
    %167 = vmatprep.subr.mxu0 %v166
    %v168 = vand.u32 %v84, 4294901760
    %169 = vmatpush1.msra.mxu0 %v168
    %v170 = vand.u32 %v87, 4294901760
    %171 = vmatprep.subr.mxu0 %v170
    %v172 = vand.u32 %v86, 4294901760
    %173 = vmatpush1.msra.mxu0 %v172
    %v174 = vand.u32 %v89, 4294901760
    %175 = vmatprep.subr.mxu0 %v174
    %v176 = vand.u32 %v88, 4294901760
    %177 = vmatpush1.msra.mxu0 %v176
    %v178 = vand.u32 %v91, 4294901760
    %179 = vmatprep.subr.mxu0 %v178
    %v180 = vand.u32 %v90, 4294901760
    %181 = vmatpush1.msra.mxu0 %v180
    %v182 = vand.u32 %v93, 4294901760
    %183 = vmatprep.subr.mxu0 %v182
    %v184 = vand.u32 %v92, 4294901760
    %185 = vmatpush1.msra.mxu0 %v184
    %v186 = vand.u32 %v95, 4294901760
    %187 = vmatprep.subr.mxu0 %v186
    %v188 = vand.u32 %v94, 4294901760
    %189 = vmatpush1.msra.mxu0 %v188
    %v190 = vand.u32 %v97, 4294901760
    %191 = vmatprep.subr.mxu0 %v190
    %v192 = vand.u32 %v96, 4294901760
    %193 = vmatpush1.msra.mxu0 %v192
    %v194 = vand.u32 %v99, 4294901760
    %195 = vmatprep.subr.mxu0 %v194
    %v196 = vand.u32 %v98, 4294901760
    %197 = vmatpush1.msra.mxu0 %v196
    %v198 = vand.u32 %v101, 4294901760
    %199 = vmatprep.subr.mxu0 %v198
    %v200 = vand.u32 %v100, 4294901760
    %201 = vmatpush1.msra.mxu0 %v200
    %v202 = vand.u32 %v103, 4294901760
    %203 = vmatprep.subr.mxu0 %v202
    %v204 = vand.u32 %v102, 4294901760
    %205 = vmatpush1.msra.mxu0 %v204
    %v206 = vand.u32 %v105, 4294901760
    %207 = vmatprep.subr.mxu0 %v206
    %v208 = vand.u32 %v104, 4294901760
    %209 = vmatpush1.msra.mxu0 %v208
    %v210 = vand.u32 %v107, 4294901760
    %211 = vmatprep.subr.mxu0 %v210
    %v212 = vand.u32 %v106, 4294901760
    %213 = vmatpush1.msra.mxu0 %v212
    %v214 = vand.u32 %v109, 4294901760
    %215 = vmatprep.subr.mxu0 %v214
    %v216 = vand.u32 %v108, 4294901760
    %217 = vmatpush1.msra.mxu0 %v216
    %v218 = vand.u32 %v111, 4294901760
    %219 = vmatprep.subr.mxu0 %v218
    %v220 = vand.u32 %v110, 4294901760
    %221 = vmatpush1.msra.mxu0 %v220
    %v222 = vand.u32 %v113, 4294901760
    %223 = vmatprep.subr.mxu0 %v222
    %v224 = vand.u32 %v112, 4294901760
    %225 = vmatpush1.msra.mxu0 %v224
    %v226 = vand.u32 %v115, 4294901760
    %227 = vmatprep.subr.mxu0 %v226
    %v228 = vand.u32 %v114, 4294901760
    %229 = vmatpush1.msra.mxu0 %v228
    %v230 = vand.u32 %v117, 4294901760
    %231 = vmatprep.subr.mxu0 %v230
    %v232 = vand.u32 %v116, 4294901760
    %233 = vmatpush1.msra.mxu0 %v232
    %v234 = vand.u32 %v119, 4294901760
    %235 = vmatprep.subr.mxu0 %v234
    %v236 = vand.u32 %v118, 4294901760
    %237 = vmatpush1.msra.mxu0 %v236
    %v238 = vand.u32 %v121, 4294901760
    %239 = vmatprep.subr.mxu0 %v238
    %v240 = vand.u32 %v120, 4294901760
    %241 = vmatpush1.msra.mxu0 %v240
    %v242 = vand.u32 %v123, 4294901760
    %243 = vmatprep.subr.mxu0 %v242
    %v244 = vand.u32 %v122, 4294901760
    %245 = vmatpush1.msra.mxu0 %v244
    %v246 = vand.u32 %v125, 4294901760
    %247 = vmatprep.subr.mxu0 %v246
    %v248 = vand.u32 %v124, 4294901760
    %249 = vmatpush1.msra.mxu0 %v248
    %v250 = vand.u32 %v127, 4294901760
    %251 = vmatprep.subr.mxu0 %v250
    %v252 = vand.u32 %v126, 4294901760
    %253 = vmatpush1.msra.mxu0 %v252
    %v254 = vand.u32 %v129, 4294901760
    %255 = vmatprep.subr.mxu0 %v254
    %v256 = vand.u32 %v128, 4294901760
    %257 = vmatpush1.msra.mxu0 %v256
    %v258 = vand.u32 %v65, 4294901760
    %v259 = vsub.f32 %v65, %v258
    %v260 = vand.u32 %v259, 4294901760
    %v261 = vsub.f32 %v259, %v260
    %v262 = vand.u32 %v261, 4294901760
    %263 = vmatprep.mubr.f32.mxu0 %v262
    %v264 = vand.u32 %v64, 4294901760
    %v265 = vsub.f32 %v64, %v264
    %v266 = vand.u32 %v265, 4294901760
    %v267 = vsub.f32 %v265, %v266
    %v268 = vand.u32 %v267, 4294901760
    %269 = vmatmul.mubr.f32.gmra.mrb[0].mxu0 %v268
    %v270 = vpop.f32.mrb[0].mxu0
    %v271 = vadd.f32 0.0, %v270
    %v272 = vpop.f32.mrb[0].mxu0
    %v273 = vadd.f32 0.0, %v272
    %274 = vdwg.mxu0
    %v275 = vand.u32 %v67, 4294901760
    %v276 = vsub.f32 %v67, %v275
    %v277 = vand.u32 %v276, 4294901760
    %v278 = vsub.f32 %v276, %v277
    %v279 = vand.u32 %v278, 4294901760
    %280 = vmatprep.subr.mxu0 %v279
    %v281 = vand.u32 %v66, 4294901760
    %v282 = vsub.f32 %v66, %v281
    %v283 = vand.u32 %v282, 4294901760
    %v284 = vsub.f32 %v282, %v283
    %v285 = vand.u32 %v284, 4294901760
    %286 = vmatpush1.msra.mxu0 %v285
    %v287 = vand.u32 %v69, 4294901760
    %v288 = vsub.f32 %v69, %v287
    %v289 = vand.u32 %v288, 4294901760
    %v290 = vsub.f32 %v288, %v289
    %v291 = vand.u32 %v290, 4294901760
    %292 = vmatprep.subr.mxu0 %v291
    %v293 = vand.u32 %v68, 4294901760
    %v294 = vsub.f32 %v68, %v293
    %v295 = vand.u32 %v294, 4294901760
    %v296 = vsub.f32 %v294, %v295
    %v297 = vand.u32 %v296, 4294901760
    %298 = vmatpush1.msra.mxu0 %v297
    %v299 = vand.u32 %v71, 4294901760
    %v300 = vsub.f32 %v71, %v299
    %v301 = vand.u32 %v300, 4294901760
    %v302 = vsub.f32 %v300, %v301
    %v303 = vand.u32 %v302, 4294901760
    %304 = vmatprep.subr.mxu0 %v303
    %v305 = vand.u32 %v70, 4294901760
    %v306 = vsub.f32 %v70, %v305
    %v307 = vand.u32 %v306, 4294901760
    %v308 = vsub.f32 %v306, %v307
    %v309 = vand.u32 %v308, 4294901760
    %310 = vmatpush1.msra.mxu0 %v309
    %v311 = vand.u32 %v73, 4294901760
    %v312 = vsub.f32 %v73, %v311
    %v313 = vand.u32 %v312, 4294901760
    %v314 = vsub.f32 %v312, %v313
    %v315 = vand.u32 %v314, 4294901760
    %316 = vmatprep.subr.mxu0 %v315
    %v317 = vand.u32 %v72, 4294901760
    %v318 = vsub.f32 %v72, %v317
    %v319 = vand.u32 %v318, 4294901760
    %v320 = vsub.f32 %v318, %v319
    %v321 = vand.u32 %v320, 4294901760
    %322 = vmatpush1.msra.mxu0 %v321
    %v323 = vand.u32 %v75, 4294901760
    %v324 = vsub.f32 %v75, %v323
    %v325 = vand.u32 %v324, 4294901760
    %v326 = vsub.f32 %v324, %v325
    %v327 = vand.u32 %v326, 4294901760
    %328 = vmatprep.subr.mxu0 %v327
    %v329 = vand.u32 %v74, 4294901760
    %v330 = vsub.f32 %v74, %v329
    %v331 = vand.u32 %v330, 4294901760
    %v332 = vsub.f32 %v330, %v331
    %v333 = vand.u32 %v332, 4294901760
    %334 = vmatpush1.msra.mxu0 %v333
    %v335 = vand.u32 %v77, 4294901760
    %v336 = vsub.f32 %v77, %v335
    %v337 = vand.u32 %v336, 4294901760
    %v338 = vsub.f32 %v336, %v337
    %v339 = vand.u32 %v338, 4294901760
    %340 = vmatprep.subr.mxu0 %v339
    %v341 = vand.u32 %v76, 4294901760
    %v342 = vsub.f32 %v76, %v341
    %v343 = vand.u32 %v342, 4294901760
    %v344 = vsub.f32 %v342, %v343
    %v345 = vand.u32 %v344, 4294901760
    %346 = vmatpush1.msra.mxu0 %v345
    %v347 = vand.u32 %v79, 4294901760
    %v348 = vsub.f32 %v79, %v347
    %v349 = vand.u32 %v348, 4294901760
    %v350 = vsub.f32 %v348, %v349
    %v351 = vand.u32 %v350, 4294901760
    %352 = vmatprep.subr.mxu0 %v351
    %v353 = vand.u32 %v78, 4294901760
    %v354 = vsub.f32 %v78, %v353
    %v355 = vand.u32 %v354, 4294901760
    %v356 = vsub.f32 %v354, %v355
    %v357 = vand.u32 %v356, 4294901760
    %358 = vmatpush1.msra.mxu0 %v357
    %v359 = vand.u32 %v81, 4294901760
    %v360 = vsub.f32 %v81, %v359
    %v361 = vand.u32 %v360, 4294901760
    %v362 = vsub.f32 %v360, %v361
    %v363 = vand.u32 %v362, 4294901760
    %364 = vmatprep.subr.mxu0 %v363
    %v365 = vand.u32 %v80, 4294901760
    %v366 = vsub.f32 %v80, %v365
    %v367 = vand.u32 %v366, 4294901760
    %v368 = vsub.f32 %v366, %v367
    %v369 = vand.u32 %v368, 4294901760
    %370 = vmatpush1.msra.mxu0 %v369
    %v371 = vand.u32 %v83, 4294901760
    %v372 = vsub.f32 %v83, %v371
    %v373 = vand.u32 %v372, 4294901760
    %v374 = vsub.f32 %v372, %v373
    %v375 = vand.u32 %v374, 4294901760
    %376 = vmatprep.subr.mxu0 %v375
    %v377 = vand.u32 %v82, 4294901760
    %v378 = vsub.f32 %v82, %v377
    %v379 = vand.u32 %v378, 4294901760
    %v380 = vsub.f32 %v378, %v379
    %v381 = vand.u32 %v380, 4294901760
    %382 = vmatpush1.msra.mxu0 %v381
    %v383 = vand.u32 %v85, 4294901760
    %v384 = vsub.f32 %v85, %v383
    %v385 = vand.u32 %v384, 4294901760
    %v386 = vsub.f32 %v384, %v385
    %v387 = vand.u32 %v386, 4294901760
    %388 = vmatprep.subr.mxu0 %v387
    %v389 = vand.u32 %v84, 4294901760
    %v390 = vsub.f32 %v84, %v389
    %v391 = vand.u32 %v390, 4294901760
    %v392 = vsub.f32 %v390, %v391
    %v393 = vand.u32 %v392, 4294901760
    %394 = vmatpush1.msra.mxu0 %v393
    %v395 = vand.u32 %v87, 4294901760
    %v396 = vsub.f32 %v87, %v395
    %v397 = vand.u32 %v396, 4294901760
    %v398 = vsub.f32 %v396, %v397
    %v399 = vand.u32 %v398, 4294901760
    %400 = vmatprep.subr.mxu0 %v399
    %v401 = vand.u32 %v86, 4294901760
    %v402 = vsub.f32 %v86, %v401
    %v403 = vand.u32 %v402, 4294901760
    %v404 = vsub.f32 %v402, %v403
    %v405 = vand.u32 %v404, 4294901760
    %406 = vmatpush1.msra.mxu0 %v405
    %v407 = vand.u32 %v89, 4294901760
    %v408 = vsub.f32 %v89, %v407
    %v409 = vand.u32 %v408, 4294901760
    %v410 = vsub.f32 %v408, %v409
    %v411 = vand.u32 %v410, 4294901760
    %412 = vmatprep.subr.mxu0 %v411
    %v413 = vand.u32 %v88, 4294901760
    %v414 = vsub.f32 %v88, %v413
    %v415 = vand.u32 %v414, 4294901760
    %v416 = vsub.f32 %v414, %v415
    %v417 = vand.u32 %v416, 4294901760
    %418 = vmatpush1.msra.mxu0 %v417
    %v419 = vand.u32 %v91, 4294901760
    %v420 = vsub.f32 %v91, %v419
    %v421 = vand.u32 %v420, 4294901760
    %v422 = vsub.f32 %v420, %v421
    %v423 = vand.u32 %v422, 4294901760
    %424 = vmatprep.subr.mxu0 %v423
    %v425 = vand.u32 %v90, 4294901760
    %v426 = vsub.f32 %v90, %v425
    %v427 = vand.u32 %v426, 4294901760
    %v428 = vsub.f32 %v426, %v427
    %v429 = vand.u32 %v428, 4294901760
    %430 = vmatpush1.msra.mxu0 %v429
    %v431 = vand.u32 %v93, 4294901760
    %v432 = vsub.f32 %v93, %v431
    %v433 = vand.u32 %v432, 4294901760
    %v434 = vsub.f32 %v432, %v433
    %v435 = vand.u32 %v434, 4294901760
    %436 = vmatprep.subr.mxu0 %v435
    %v437 = vand.u32 %v92, 4294901760
    %v438 = vsub.f32 %v92, %v437
    %v439 = vand.u32 %v438, 4294901760
    %v440 = vsub.f32 %v438, %v439
    %v441 = vand.u32 %v440, 4294901760
    %442 = vmatpush1.msra.mxu0 %v441
    %v443 = vand.u32 %v95, 4294901760
    %v444 = vsub.f32 %v95, %v443
    %v445 = vand.u32 %v444, 4294901760
    %v446 = vsub.f32 %v444, %v445
    %v447 = vand.u32 %v446, 4294901760
    %448 = vmatprep.subr.mxu0 %v447
    %v449 = vand.u32 %v94, 4294901760
    %v450 = vsub.f32 %v94, %v449
    %v451 = vand.u32 %v450, 4294901760
    %v452 = vsub.f32 %v450, %v451
    %v453 = vand.u32 %v452, 4294901760
    %454 = vmatpush1.msra.mxu0 %v453
    %v455 = vand.u32 %v97, 4294901760
    %v456 = vsub.f32 %v97, %v455
    %v457 = vand.u32 %v456, 4294901760
    %v458 = vsub.f32 %v456, %v457
    %v459 = vand.u32 %v458, 4294901760
    %460 = vmatprep.subr.mxu0 %v459
    %v461 = vand.u32 %v96, 4294901760
    %v462 = vsub.f32 %v96, %v461
    %v463 = vand.u32 %v462, 4294901760
    %v464 = vsub.f32 %v462, %v463
    %v465 = vand.u32 %v464, 4294901760
    %466 = vmatpush1.msra.mxu0 %v465
    %v467 = vand.u32 %v99, 4294901760
    %v468 = vsub.f32 %v99, %v467
    %v469 = vand.u32 %v468, 4294901760
    %v470 = vsub.f32 %v468, %v469
    %v471 = vand.u32 %v470, 4294901760
    %472 = vmatprep.subr.mxu0 %v471
    %v473 = vand.u32 %v98, 4294901760
    %v474 = vsub.f32 %v98, %v473
    %v475 = vand.u32 %v474, 4294901760
    %v476 = vsub.f32 %v474, %v475
    %v477 = vand.u32 %v476, 4294901760
    %478 = vmatpush1.msra.mxu0 %v477
    %v479 = vand.u32 %v101, 4294901760
    %v480 = vsub.f32 %v101, %v479
    %v481 = vand.u32 %v480, 4294901760
    %v482 = vsub.f32 %v480, %v481
    %v483 = vand.u32 %v482, 4294901760
    %484 = vmatprep.subr.mxu0 %v483
    %v485 = vand.u32 %v100, 4294901760
    %v486 = vsub.f32 %v100, %v485
    %v487 = vand.u32 %v486, 4294901760
    %v488 = vsub.f32 %v486, %v487
    %v489 = vand.u32 %v488, 4294901760
    %490 = vmatpush1.msra.mxu0 %v489
    %v491 = vand.u32 %v103, 4294901760
    %v492 = vsub.f32 %v103, %v491
    %v493 = vand.u32 %v492, 4294901760
    %v494 = vsub.f32 %v492, %v493
    %v495 = vand.u32 %v494, 4294901760
    %496 = vmatprep.subr.mxu0 %v495
    %v497 = vand.u32 %v102, 4294901760
    %v498 = vsub.f32 %v102, %v497
    %v499 = vand.u32 %v498, 4294901760
    %v500 = vsub.f32 %v498, %v499
    %v501 = vand.u32 %v500, 4294901760
    %502 = vmatpush1.msra.mxu0 %v501
    %v503 = vand.u32 %v105, 4294901760
    %v504 = vsub.f32 %v105, %v503
    %v505 = vand.u32 %v504, 4294901760
    %v506 = vsub.f32 %v504, %v505
    %v507 = vand.u32 %v506, 4294901760
    %508 = vmatprep.subr.mxu0 %v507
    %v509 = vand.u32 %v104, 4294901760
    %v510 = vsub.f32 %v104, %v509
    %v511 = vand.u32 %v510, 4294901760
    %v512 = vsub.f32 %v510, %v511
    %v513 = vand.u32 %v512, 4294901760
    %514 = vmatpush1.msra.mxu0 %v513
    %v515 = vand.u32 %v107, 4294901760
    %v516 = vsub.f32 %v107, %v515
    %v517 = vand.u32 %v516, 4294901760
    %v518 = vsub.f32 %v516, %v517
    %v519 = vand.u32 %v518, 4294901760
    %520 = vmatprep.subr.mxu0 %v519
    %v521 = vand.u32 %v106, 4294901760
    %v522 = vsub.f32 %v106, %v521
    %v523 = vand.u32 %v522, 4294901760
    %v524 = vsub.f32 %v522, %v523
    %v525 = vand.u32 %v524, 4294901760
    %526 = vmatpush1.msra.mxu0 %v525
    %v527 = vand.u32 %v109, 4294901760
    %v528 = vsub.f32 %v109, %v527
    %v529 = vand.u32 %v528, 4294901760
    %v530 = vsub.f32 %v528, %v529
    %v531 = vand.u32 %v530, 4294901760
    %532 = vmatprep.subr.mxu0 %v531
    %v533 = vand.u32 %v108, 4294901760
    %v534 = vsub.f32 %v108, %v533
    %v535 = vand.u32 %v534, 4294901760
    %v536 = vsub.f32 %v534, %v535
    %v537 = vand.u32 %v536, 4294901760
    %538 = vmatpush1.msra.mxu0 %v537
    %v539 = vand.u32 %v111, 4294901760
    %v540 = vsub.f32 %v111, %v539
    %v541 = vand.u32 %v540, 4294901760
    %v542 = vsub.f32 %v540, %v541
    %v543 = vand.u32 %v542, 4294901760
    %544 = vmatprep.subr.mxu0 %v543
    %v545 = vand.u32 %v110, 4294901760
    %v546 = vsub.f32 %v110, %v545
    %v547 = vand.u32 %v546, 4294901760
    %v548 = vsub.f32 %v546, %v547
    %v549 = vand.u32 %v548, 4294901760
    %550 = vmatpush1.msra.mxu0 %v549
    %v551 = vand.u32 %v113, 4294901760
    %v552 = vsub.f32 %v113, %v551
    %v553 = vand.u32 %v552, 4294901760
    %v554 = vsub.f32 %v552, %v553
    %v555 = vand.u32 %v554, 4294901760
    %556 = vmatprep.subr.mxu0 %v555
    %v557 = vand.u32 %v112, 4294901760
    %v558 = vsub.f32 %v112, %v557
    %v559 = vand.u32 %v558, 4294901760
    %v560 = vsub.f32 %v558, %v559
    %v561 = vand.u32 %v560, 4294901760
    %562 = vmatpush1.msra.mxu0 %v561
    %v563 = vand.u32 %v115, 4294901760
    %v564 = vsub.f32 %v115, %v563
    %v565 = vand.u32 %v564, 4294901760
    %v566 = vsub.f32 %v564, %v565
    %v567 = vand.u32 %v566, 4294901760
    %568 = vmatprep.subr.mxu0 %v567
    %v569 = vand.u32 %v114, 4294901760
    %v570 = vsub.f32 %v114, %v569
    %v571 = vand.u32 %v570, 4294901760
    %v572 = vsub.f32 %v570, %v571
    %v573 = vand.u32 %v572, 4294901760
    %574 = vmatpush1.msra.mxu0 %v573
    %v575 = vand.u32 %v117, 4294901760
    %v576 = vsub.f32 %v117, %v575
    %v577 = vand.u32 %v576, 4294901760
    %v578 = vsub.f32 %v576, %v577
    %v579 = vand.u32 %v578, 4294901760
    %580 = vmatprep.subr.mxu0 %v579
    %v581 = vand.u32 %v116, 4294901760
    %v582 = vsub.f32 %v116, %v581
    %v583 = vand.u32 %v582, 4294901760
    %v584 = vsub.f32 %v582, %v583
    %v585 = vand.u32 %v584, 4294901760
    %586 = vmatpush1.msra.mxu0 %v585
    %v587 = vand.u32 %v119, 4294901760
    %v588 = vsub.f32 %v119, %v587
    %v589 = vand.u32 %v588, 4294901760
    %v590 = vsub.f32 %v588, %v589
    %v591 = vand.u32 %v590, 4294901760
    %592 = vmatprep.subr.mxu0 %v591
    %v593 = vand.u32 %v118, 4294901760
    %v594 = vsub.f32 %v118, %v593
    %v595 = vand.u32 %v594, 4294901760
    %v596 = vsub.f32 %v594, %v595
    %v597 = vand.u32 %v596, 4294901760
    %598 = vmatpush1.msra.mxu0 %v597
    %v599 = vand.u32 %v121, 4294901760
    %v600 = vsub.f32 %v121, %v599
    %v601 = vand.u32 %v600, 4294901760
    %v602 = vsub.f32 %v600, %v601
    %v603 = vand.u32 %v602, 4294901760
    %604 = vmatprep.subr.mxu0 %v603
    %v605 = vand.u32 %v120, 4294901760
    %v606 = vsub.f32 %v120, %v605
    %v607 = vand.u32 %v606, 4294901760
    %v608 = vsub.f32 %v606, %v607
    %v609 = vand.u32 %v608, 4294901760
    %610 = vmatpush1.msra.mxu0 %v609
    %v611 = vand.u32 %v123, 4294901760
    %v612 = vsub.f32 %v123, %v611
    %v613 = vand.u32 %v612, 4294901760
    %v614 = vsub.f32 %v612, %v613
    %v615 = vand.u32 %v614, 4294901760
    %616 = vmatprep.subr.mxu0 %v615
    %v617 = vand.u32 %v122, 4294901760
    %v618 = vsub.f32 %v122, %v617
    %v619 = vand.u32 %v618, 4294901760
    %v620 = vsub.f32 %v618, %v619
    %v621 = vand.u32 %v620, 4294901760
    %622 = vmatpush1.msra.mxu0 %v621
    %v623 = vand.u32 %v125, 4294901760
    %v624 = vsub.f32 %v125, %v623
    %v625 = vand.u32 %v624, 4294901760
    %v626 = vsub.f32 %v624, %v625
    %v627 = vand.u32 %v626, 4294901760
    %628 = vmatprep.subr.mxu0 %v627
    %v629 = vand.u32 %v124, 4294901760
    %v630 = vsub.f32 %v124, %v629
    %v631 = vand.u32 %v630, 4294901760
    %v632 = vsub.f32 %v630, %v631
    %v633 = vand.u32 %v632, 4294901760
    %634 = vmatpush1.msra.mxu0 %v633
    %v635 = vand.u32 %v127, 4294901760
    %v636 = vsub.f32 %v127, %v635
    %v637 = vand.u32 %v636, 4294901760
    %v638 = vsub.f32 %v636, %v637
    %v639 = vand.u32 %v638, 4294901760
    %640 = vmatprep.subr.mxu0 %v639
    %v641 = vand.u32 %v126, 4294901760
    %v642 = vsub.f32 %v126, %v641
    %v643 = vand.u32 %v642, 4294901760
    %v644 = vsub.f32 %v642, %v643
    %v645 = vand.u32 %v644, 4294901760
    %646 = vmatpush1.msra.mxu0 %v645
    %v647 = vand.u32 %v129, 4294901760
    %v648 = vsub.f32 %v129, %v647
    %v649 = vand.u32 %v648, 4294901760
    %v650 = vsub.f32 %v648, %v649
    %v651 = vand.u32 %v650, 4294901760
    %652 = vmatprep.subr.mxu0 %v651
    %v653 = vand.u32 %v128, 4294901760
    %v654 = vsub.f32 %v128, %v653
    %v655 = vand.u32 %v654, 4294901760
    %v656 = vsub.f32 %v654, %v655
    %v657 = vand.u32 %v656, 4294901760
    %658 = vmatpush1.msra.mxu0 %v657
    %v659 = vand.u32 %v65, 4294901760
    %660 = vmatprep.mubr.f32.mxu0 %v659
    %v661 = vand.u32 %v64, 4294901760
    %662 = vmatmul.mubr.f32.gmra.mrb[0].mxu0 %v661
    %v663 = vpop.f32.mrb[0].mxu0
    %v664 = vadd.f32 %v271, %v663
    %v665 = vpop.f32.mrb[0].mxu0
    %v666 = vadd.f32 %v273, %v665
    %667 = vdwg.mxu0
    %v668 = vand.u32 %v67, 4294901760
    %v669 = vsub.f32 %v67, %v668
    %670 = vmatprep.subr.mxu0 %v669
    %v671 = vand.u32 %v66, 4294901760
    %v672 = vsub.f32 %v66, %v671
    %673 = vmatpush1.msra.mxu0 %v672
    %v674 = vand.u32 %v69, 4294901760
    %v675 = vsub.f32 %v69, %v674
    %676 = vmatprep.subr.mxu0 %v675
    %v677 = vand.u32 %v68, 4294901760
    %v678 = vsub.f32 %v68, %v677
    %679 = vmatpush1.msra.mxu0 %v678
    %v680 = vand.u32 %v71, 4294901760
    %v681 = vsub.f32 %v71, %v680
    %682 = vmatprep.subr.mxu0 %v681
    %v683 = vand.u32 %v70, 4294901760
    %v684 = vsub.f32 %v70, %v683
    %685 = vmatpush1.msra.mxu0 %v684
    %v686 = vand.u32 %v73, 4294901760
    %v687 = vsub.f32 %v73, %v686
    %688 = vmatprep.subr.mxu0 %v687
    %v689 = vand.u32 %v72, 4294901760
    %v690 = vsub.f32 %v72, %v689
    %691 = vmatpush1.msra.mxu0 %v690
    %v692 = vand.u32 %v75, 4294901760
    %v693 = vsub.f32 %v75, %v692
    %694 = vmatprep.subr.mxu0 %v693
    %v695 = vand.u32 %v74, 4294901760
    %v696 = vsub.f32 %v74, %v695
    %697 = vmatpush1.msra.mxu0 %v696
    %v698 = vand.u32 %v77, 4294901760
    %v699 = vsub.f32 %v77, %v698
    %700 = vmatprep.subr.mxu0 %v699
    %v701 = vand.u32 %v76, 4294901760
    %v702 = vsub.f32 %v76, %v701
    %703 = vmatpush1.msra.mxu0 %v702
    %v704 = vand.u32 %v79, 4294901760
    %v705 = vsub.f32 %v79, %v704
    %706 = vmatprep.subr.mxu0 %v705
    %v707 = vand.u32 %v78, 4294901760
    %v708 = vsub.f32 %v78, %v707
    %709 = vmatpush1.msra.mxu0 %v708
    %v710 = vand.u32 %v81, 4294901760
    %v711 = vsub.f32 %v81, %v710
    %712 = vmatprep.subr.mxu0 %v711
    %v713 = vand.u32 %v80, 4294901760
    %v714 = vsub.f32 %v80, %v713
    %715 = vmatpush1.msra.mxu0 %v714
    %v716 = vand.u32 %v83, 4294901760
    %v717 = vsub.f32 %v83, %v716
    %718 = vmatprep.subr.mxu0 %v717
    %v719 = vand.u32 %v82, 4294901760
    %v720 = vsub.f32 %v82, %v719
    %721 = vmatpush1.msra.mxu0 %v720
    %v722 = vand.u32 %v85, 4294901760
    %v723 = vsub.f32 %v85, %v722
    %724 = vmatprep.subr.mxu0 %v723
    %v725 = vand.u32 %v84, 4294901760
    %v726 = vsub.f32 %v84, %v725
    %727 = vmatpush1.msra.mxu0 %v726
    %v728 = vand.u32 %v87, 4294901760
    %v729 = vsub.f32 %v87, %v728
    %730 = vmatprep.subr.mxu0 %v729
    %v731 = vand.u32 %v86, 4294901760
    %v732 = vsub.f32 %v86, %v731
    %733 = vmatpush1.msra.mxu0 %v732
    %v734 = vand.u32 %v89, 4294901760
    %v735 = vsub.f32 %v89, %v734
    %736 = vmatprep.subr.mxu0 %v735
    %v737 = vand.u32 %v88, 4294901760
    %v738 = vsub.f32 %v88, %v737
    %739 = vmatpush1.msra.mxu0 %v738
    %v740 = vand.u32 %v91, 4294901760
    %v741 = vsub.f32 %v91, %v740
    %742 = vmatprep.subr.mxu0 %v741
    %v743 = vand.u32 %v90, 4294901760
    %v744 = vsub.f32 %v90, %v743
    %745 = vmatpush1.msra.mxu0 %v744
    %v746 = vand.u32 %v93, 4294901760
    %v747 = vsub.f32 %v93, %v746
    %748 = vmatprep.subr.mxu0 %v747
    %v749 = vand.u32 %v92, 4294901760
    %v750 = vsub.f32 %v92, %v749
    %751 = vmatpush1.msra.mxu0 %v750
    %v752 = vand.u32 %v95, 4294901760
    %v753 = vsub.f32 %v95, %v752
    %754 = vmatprep.subr.mxu0 %v753
    %v755 = vand.u32 %v94, 4294901760
    %v756 = vsub.f32 %v94, %v755
    %757 = vmatpush1.msra.mxu0 %v756
    %v758 = vand.u32 %v97, 4294901760
    %v759 = vsub.f32 %v97, %v758
    %760 = vmatprep.subr.mxu0 %v759
    %v761 = vand.u32 %v96, 4294901760
    %v762 = vsub.f32 %v96, %v761
    %763 = vmatpush1.msra.mxu0 %v762
    %v764 = vand.u32 %v99, 4294901760
    %v765 = vsub.f32 %v99, %v764
    %766 = vmatprep.subr.mxu0 %v765
    %v767 = vand.u32 %v98, 4294901760
    %v768 = vsub.f32 %v98, %v767
    %769 = vmatpush1.msra.mxu0 %v768
    %v770 = vand.u32 %v101, 4294901760
    %v771 = vsub.f32 %v101, %v770
    %772 = vmatprep.subr.mxu0 %v771
    %v773 = vand.u32 %v100, 4294901760
    %v774 = vsub.f32 %v100, %v773
    %775 = vmatpush1.msra.mxu0 %v774
    %v776 = vand.u32 %v103, 4294901760
    %v777 = vsub.f32 %v103, %v776
    %778 = vmatprep.subr.mxu0 %v777
    %v779 = vand.u32 %v102, 4294901760
    %v780 = vsub.f32 %v102, %v779
    %781 = vmatpush1.msra.mxu0 %v780
    %v782 = vand.u32 %v105, 4294901760
    %v783 = vsub.f32 %v105, %v782
    %784 = vmatprep.subr.mxu0 %v783
    %v785 = vand.u32 %v104, 4294901760
    %v786 = vsub.f32 %v104, %v785
    %787 = vmatpush1.msra.mxu0 %v786
    %v788 = vand.u32 %v107, 4294901760
    %v789 = vsub.f32 %v107, %v788
    %790 = vmatprep.subr.mxu0 %v789
    %v791 = vand.u32 %v106, 4294901760
    %v792 = vsub.f32 %v106, %v791
    %793 = vmatpush1.msra.mxu0 %v792
    %v794 = vand.u32 %v109, 4294901760
    %v795 = vsub.f32 %v109, %v794
    %796 = vmatprep.subr.mxu0 %v795
    %v797 = vand.u32 %v108, 4294901760
    %v798 = vsub.f32 %v108, %v797
    %799 = vmatpush1.msra.mxu0 %v798
    %v800 = vand.u32 %v111, 4294901760
    %v801 = vsub.f32 %v111, %v800
    %802 = vmatprep.subr.mxu0 %v801
    %v803 = vand.u32 %v110, 4294901760
    %v804 = vsub.f32 %v110, %v803
    %805 = vmatpush1.msra.mxu0 %v804
    %v806 = vand.u32 %v113, 4294901760
    %v807 = vsub.f32 %v113, %v806
    %808 = vmatprep.subr.mxu0 %v807
    %v809 = vand.u32 %v112, 4294901760
    %v810 = vsub.f32 %v112, %v809
    %811 = vmatpush1.msra.mxu0 %v810
    %v812 = vand.u32 %v115, 4294901760
    %v813 = vsub.f32 %v115, %v812
    %814 = vmatprep.subr.mxu0 %v813
    %v815 = vand.u32 %v114, 4294901760
    %v816 = vsub.f32 %v114, %v815
    %817 = vmatpush1.msra.mxu0 %v816
    %v818 = vand.u32 %v117, 4294901760
    %v819 = vsub.f32 %v117, %v818
    %820 = vmatprep.subr.mxu0 %v819
    %v821 = vand.u32 %v116, 4294901760
    %v822 = vsub.f32 %v116, %v821
    %823 = vmatpush1.msra.mxu0 %v822
    %v824 = vand.u32 %v119, 4294901760
    %v825 = vsub.f32 %v119, %v824
    %826 = vmatprep.subr.mxu0 %v825
    %v827 = vand.u32 %v118, 4294901760
    %v828 = vsub.f32 %v118, %v827
    %829 = vmatpush1.msra.mxu0 %v828
    %v830 = vand.u32 %v121, 4294901760
    %v831 = vsub.f32 %v121, %v830
    %832 = vmatprep.subr.mxu0 %v831
    %v833 = vand.u32 %v120, 4294901760
    %v834 = vsub.f32 %v120, %v833
    %835 = vmatpush1.msra.mxu0 %v834
    %v836 = vand.u32 %v123, 4294901760
    %v837 = vsub.f32 %v123, %v836
    %838 = vmatprep.subr.mxu0 %v837
    %v839 = vand.u32 %v122, 4294901760
    %v840 = vsub.f32 %v122, %v839
    %841 = vmatpush1.msra.mxu0 %v840
    %v842 = vand.u32 %v125, 4294901760
    %v843 = vsub.f32 %v125, %v842
    %844 = vmatprep.subr.mxu0 %v843
    %v845 = vand.u32 %v124, 4294901760
    %v846 = vsub.f32 %v124, %v845
    %847 = vmatpush1.msra.mxu0 %v846
    %v848 = vand.u32 %v127, 4294901760
    %v849 = vsub.f32 %v127, %v848
    %850 = vmatprep.subr.mxu0 %v849
    %v851 = vand.u32 %v126, 4294901760
    %v852 = vsub.f32 %v126, %v851
    %853 = vmatpush1.msra.mxu0 %v852
    %v854 = vand.u32 %v129, 4294901760
    %v855 = vsub.f32 %v129, %v854
    %856 = vmatprep.subr.mxu0 %v855
    %v857 = vand.u32 %v128, 4294901760
    %v858 = vsub.f32 %v128, %v857
    %859 = vmatpush1.msra.mxu0 %v858
    %v860 = vand.u32 %v65, 4294901760
    %v861 = vsub.f32 %v65, %v860
    %862 = vmatprep.mubr.f32.mxu0 %v861
    %v863 = vand.u32 %v64, 4294901760
    %v864 = vsub.f32 %v64, %v863
    %865 = vmatmul.mubr.f32.gmra.mrb[0].mxu0 %v864
    %v866 = vpop.f32.mrb[0].mxu0
    %v867 = vadd.f32 %v664, %v866
    %v868 = vpop.f32.mrb[0].mxu0
    %v869 = vadd.f32 %v666, %v868
    %870 = vdwg.mxu0
    %v871 = vand.u32 %v67, 4294901760
    %872 = vmatprep.subr.mxu0 %v871
    %v873 = vand.u32 %v66, 4294901760
    %874 = vmatpush1.msra.mxu0 %v873
    %v875 = vand.u32 %v69, 4294901760
    %876 = vmatprep.subr.mxu0 %v875
    %v877 = vand.u32 %v68, 4294901760
    %878 = vmatpush1.msra.mxu0 %v877
    %v879 = vand.u32 %v71, 4294901760
    %880 = vmatprep.subr.mxu0 %v879
    %v881 = vand.u32 %v70, 4294901760
    %882 = vmatpush1.msra.mxu0 %v881
    %v883 = vand.u32 %v73, 4294901760
    %884 = vmatprep.subr.mxu0 %v883
    %v885 = vand.u32 %v72, 4294901760
    %886 = vmatpush1.msra.mxu0 %v885
    %v887 = vand.u32 %v75, 4294901760
    %888 = vmatprep.subr.mxu0 %v887
    %v889 = vand.u32 %v74, 4294901760
    %890 = vmatpush1.msra.mxu0 %v889
    %v891 = vand.u32 %v77, 4294901760
    %892 = vmatprep.subr.mxu0 %v891
    %v893 = vand.u32 %v76, 4294901760
    %894 = vmatpush1.msra.mxu0 %v893
    %v895 = vand.u32 %v79, 4294901760
    %896 = vmatprep.subr.mxu0 %v895
    %v897 = vand.u32 %v78, 4294901760
    %898 = vmatpush1.msra.mxu0 %v897
    %v899 = vand.u32 %v81, 4294901760
    %900 = vmatprep.subr.mxu0 %v899
    %v901 = vand.u32 %v80, 4294901760
    %902 = vmatpush1.msra.mxu0 %v901
    %v903 = vand.u32 %v83, 4294901760
    %904 = vmatprep.subr.mxu0 %v903
    %v905 = vand.u32 %v82, 4294901760
    %906 = vmatpush1.msra.mxu0 %v905
    %v907 = vand.u32 %v85, 4294901760
    %908 = vmatprep.subr.mxu0 %v907
    %v909 = vand.u32 %v84, 4294901760
    %910 = vmatpush1.msra.mxu0 %v909
    %v911 = vand.u32 %v87, 4294901760
    %912 = vmatprep.subr.mxu0 %v911
    %v913 = vand.u32 %v86, 4294901760
    %914 = vmatpush1.msra.mxu0 %v913
    %v915 = vand.u32 %v89, 4294901760
    %916 = vmatprep.subr.mxu0 %v915
    %v917 = vand.u32 %v88, 4294901760
    %918 = vmatpush1.msra.mxu0 %v917
    %v919 = vand.u32 %v91, 4294901760
    %920 = vmatprep.subr.mxu0 %v919
    %v921 = vand.u32 %v90, 4294901760
    %922 = vmatpush1.msra.mxu0 %v921
    %v923 = vand.u32 %v93, 4294901760
    %924 = vmatprep.subr.mxu0 %v923
    %v925 = vand.u32 %v92, 4294901760
    %926 = vmatpush1.msra.mxu0 %v925
    %v927 = vand.u32 %v95, 4294901760
    %928 = vmatprep.subr.mxu0 %v927
    %v929 = vand.u32 %v94, 4294901760
    %930 = vmatpush1.msra.mxu0 %v929
    %v931 = vand.u32 %v97, 4294901760
    %932 = vmatprep.subr.mxu0 %v931
    %v933 = vand.u32 %v96, 4294901760
    %934 = vmatpush1.msra.mxu0 %v933
    %v935 = vand.u32 %v99, 4294901760
    %936 = vmatprep.subr.mxu0 %v935
    %v937 = vand.u32 %v98, 4294901760
    %938 = vmatpush1.msra.mxu0 %v937
    %v939 = vand.u32 %v101, 4294901760
    %940 = vmatprep.subr.mxu0 %v939
    %v941 = vand.u32 %v100, 4294901760
    %942 = vmatpush1.msra.mxu0 %v941
    %v943 = vand.u32 %v103, 4294901760
    %944 = vmatprep.subr.mxu0 %v943
    %v945 = vand.u32 %v102, 4294901760
    %946 = vmatpush1.msra.mxu0 %v945
    %v947 = vand.u32 %v105, 4294901760
    %948 = vmatprep.subr.mxu0 %v947
    %v949 = vand.u32 %v104, 4294901760
    %950 = vmatpush1.msra.mxu0 %v949
    %v951 = vand.u32 %v107, 4294901760
    %952 = vmatprep.subr.mxu0 %v951
    %v953 = vand.u32 %v106, 4294901760
    %954 = vmatpush1.msra.mxu0 %v953
    %v955 = vand.u32 %v109, 4294901760
    %956 = vmatprep.subr.mxu0 %v955
    %v957 = vand.u32 %v108, 4294901760
    %958 = vmatpush1.msra.mxu0 %v957
    %v959 = vand.u32 %v111, 4294901760
    %960 = vmatprep.subr.mxu0 %v959
    %v961 = vand.u32 %v110, 4294901760
    %962 = vmatpush1.msra.mxu0 %v961
    %v963 = vand.u32 %v113, 4294901760
    %964 = vmatprep.subr.mxu0 %v963
    %v965 = vand.u32 %v112, 4294901760
    %966 = vmatpush1.msra.mxu0 %v965
    %v967 = vand.u32 %v115, 4294901760
    %968 = vmatprep.subr.mxu0 %v967
    %v969 = vand.u32 %v114, 4294901760
    %970 = vmatpush1.msra.mxu0 %v969
    %v971 = vand.u32 %v117, 4294901760
    %972 = vmatprep.subr.mxu0 %v971
    %v973 = vand.u32 %v116, 4294901760
    %974 = vmatpush1.msra.mxu0 %v973
    %v975 = vand.u32 %v119, 4294901760
    %976 = vmatprep.subr.mxu0 %v975
    %v977 = vand.u32 %v118, 4294901760
    %978 = vmatpush1.msra.mxu0 %v977
    %v979 = vand.u32 %v121, 4294901760
    %980 = vmatprep.subr.mxu0 %v979
    %v981 = vand.u32 %v120, 4294901760
    %982 = vmatpush1.msra.mxu0 %v981
    %v983 = vand.u32 %v123, 4294901760
    %984 = vmatprep.subr.mxu0 %v983
    %v985 = vand.u32 %v122, 4294901760
    %986 = vmatpush1.msra.mxu0 %v985
    %v987 = vand.u32 %v125, 4294901760
    %988 = vmatprep.subr.mxu0 %v987
    %v989 = vand.u32 %v124, 4294901760
    %990 = vmatpush1.msra.mxu0 %v989
    %v991 = vand.u32 %v127, 4294901760
    %992 = vmatprep.subr.mxu0 %v991
    %v993 = vand.u32 %v126, 4294901760
    %994 = vmatpush1.msra.mxu0 %v993
    %v995 = vand.u32 %v129, 4294901760
    %996 = vmatprep.subr.mxu0 %v995
    %v997 = vand.u32 %v128, 4294901760
    %998 = vmatpush1.msra.mxu0 %v997
    %v999 = vand.u32 %v65, 4294901760
    %v1000 = vsub.f32 %v65, %v999
    %v1001 = vand.u32 %v1000, 4294901760
    %1002 = vmatprep.mubr.f32.mxu0 %v1001
    %v1003 = vand.u32 %v64, 4294901760
    %v1004 = vsub.f32 %v64, %v1003
    %v1005 = vand.u32 %v1004, 4294901760
    %1006 = vmatmul.mubr.f32.gmra.mrb[0].mxu0 %v1005
    %v1007 = vpop.f32.mrb[0].mxu0
    %v1008 = vadd.f32 %v867, %v1007
    %v1009 = vpop.f32.mrb[0].mxu0
    %v1010 = vadd.f32 %v869, %v1009
    %1011 = vdwg.mxu0
    %v1012 = vand.u32 %v67, 4294901760
    %v1013 = vsub.f32 %v67, %v1012
    %v1014 = vand.u32 %v1013, 4294901760
    %1015 = vmatprep.subr.mxu0 %v1014
    %v1016 = vand.u32 %v66, 4294901760
    %v1017 = vsub.f32 %v66, %v1016
    %v1018 = vand.u32 %v1017, 4294901760
    %1019 = vmatpush1.msra.mxu0 %v1018
    %v1020 = vand.u32 %v69, 4294901760
    %v1021 = vsub.f32 %v69, %v1020
    %v1022 = vand.u32 %v1021, 4294901760
    %1023 = vmatprep.subr.mxu0 %v1022
    %v1024 = vand.u32 %v68, 4294901760
    %v1025 = vsub.f32 %v68, %v1024
    %v1026 = vand.u32 %v1025, 4294901760
    %1027 = vmatpush1.msra.mxu0 %v1026
    %v1028 = vand.u32 %v71, 4294901760
    %v1029 = vsub.f32 %v71, %v1028
    %v1030 = vand.u32 %v1029, 4294901760
    %1031 = vmatprep.subr.mxu0 %v1030
    %v1032 = vand.u32 %v70, 4294901760
    %v1033 = vsub.f32 %v70, %v1032
    %v1034 = vand.u32 %v1033, 4294901760
    %1035 = vmatpush1.msra.mxu0 %v1034
    %v1036 = vand.u32 %v73, 4294901760
    %v1037 = vsub.f32 %v73, %v1036
    %v1038 = vand.u32 %v1037, 4294901760
    %1039 = vmatprep.subr.mxu0 %v1038
    %v1040 = vand.u32 %v72, 4294901760
    %v1041 = vsub.f32 %v72, %v1040
    %v1042 = vand.u32 %v1041, 4294901760
    %1043 = vmatpush1.msra.mxu0 %v1042
    %v1044 = vand.u32 %v75, 4294901760
    %v1045 = vsub.f32 %v75, %v1044
    %v1046 = vand.u32 %v1045, 4294901760
    %1047 = vmatprep.subr.mxu0 %v1046
    %v1048 = vand.u32 %v74, 4294901760
    %v1049 = vsub.f32 %v74, %v1048
    %v1050 = vand.u32 %v1049, 4294901760
    %1051 = vmatpush1.msra.mxu0 %v1050
    %v1052 = vand.u32 %v77, 4294901760
    %v1053 = vsub.f32 %v77, %v1052
    %v1054 = vand.u32 %v1053, 4294901760
    %1055 = vmatprep.subr.mxu0 %v1054
    %v1056 = vand.u32 %v76, 4294901760
    %v1057 = vsub.f32 %v76, %v1056
    %v1058 = vand.u32 %v1057, 4294901760
    %1059 = vmatpush1.msra.mxu0 %v1058
    %v1060 = vand.u32 %v79, 4294901760
    %v1061 = vsub.f32 %v79, %v1060
    %v1062 = vand.u32 %v1061, 4294901760
    %1063 = vmatprep.subr.mxu0 %v1062
    %v1064 = vand.u32 %v78, 4294901760
    %v1065 = vsub.f32 %v78, %v1064
    %v1066 = vand.u32 %v1065, 4294901760
    %1067 = vmatpush1.msra.mxu0 %v1066
    %v1068 = vand.u32 %v81, 4294901760
    %v1069 = vsub.f32 %v81, %v1068
    %v1070 = vand.u32 %v1069, 4294901760
    %1071 = vmatprep.subr.mxu0 %v1070
    %v1072 = vand.u32 %v80, 4294901760
    %v1073 = vsub.f32 %v80, %v1072
    %v1074 = vand.u32 %v1073, 4294901760
    %1075 = vmatpush1.msra.mxu0 %v1074
    %v1076 = vand.u32 %v83, 4294901760
    %v1077 = vsub.f32 %v83, %v1076
    %v1078 = vand.u32 %v1077, 4294901760
    %1079 = vmatprep.subr.mxu0 %v1078
    %v1080 = vand.u32 %v82, 4294901760
    %v1081 = vsub.f32 %v82, %v1080
    %v1082 = vand.u32 %v1081, 4294901760
    %1083 = vmatpush1.msra.mxu0 %v1082
    %v1084 = vand.u32 %v85, 4294901760
    %v1085 = vsub.f32 %v85, %v1084
    %v1086 = vand.u32 %v1085, 4294901760
    %1087 = vmatprep.subr.mxu0 %v1086
    %v1088 = vand.u32 %v84, 4294901760
    %v1089 = vsub.f32 %v84, %v1088
    %v1090 = vand.u32 %v1089, 4294901760
    %1091 = vmatpush1.msra.mxu0 %v1090
    %v1092 = vand.u32 %v87, 4294901760
    %v1093 = vsub.f32 %v87, %v1092
    %v1094 = vand.u32 %v1093, 4294901760
    %1095 = vmatprep.subr.mxu0 %v1094
    %v1096 = vand.u32 %v86, 4294901760
    %v1097 = vsub.f32 %v86, %v1096
    %v1098 = vand.u32 %v1097, 4294901760
    %1099 = vmatpush1.msra.mxu0 %v1098
    %v1100 = vand.u32 %v89, 4294901760
    %v1101 = vsub.f32 %v89, %v1100
    %v1102 = vand.u32 %v1101, 4294901760
    %1103 = vmatprep.subr.mxu0 %v1102
    %v1104 = vand.u32 %v88, 4294901760
    %v1105 = vsub.f32 %v88, %v1104
    %v1106 = vand.u32 %v1105, 4294901760
    %1107 = vmatpush1.msra.mxu0 %v1106
    %v1108 = vand.u32 %v91, 4294901760
    %v1109 = vsub.f32 %v91, %v1108
    %v1110 = vand.u32 %v1109, 4294901760
    %1111 = vmatprep.subr.mxu0 %v1110
    %v1112 = vand.u32 %v90, 4294901760
    %v1113 = vsub.f32 %v90, %v1112
    %v1114 = vand.u32 %v1113, 4294901760
    %1115 = vmatpush1.msra.mxu0 %v1114
    %v1116 = vand.u32 %v93, 4294901760
    %v1117 = vsub.f32 %v93, %v1116
    %v1118 = vand.u32 %v1117, 4294901760
    %1119 = vmatprep.subr.mxu0 %v1118
    %v1120 = vand.u32 %v92, 4294901760
    %v1121 = vsub.f32 %v92, %v1120
    %v1122 = vand.u32 %v1121, 4294901760
    %1123 = vmatpush1.msra.mxu0 %v1122
    %v1124 = vand.u32 %v95, 4294901760
    %v1125 = vsub.f32 %v95, %v1124
    %v1126 = vand.u32 %v1125, 4294901760
    %1127 = vmatprep.subr.mxu0 %v1126
    %v1128 = vand.u32 %v94, 4294901760
    %v1129 = vsub.f32 %v94, %v1128
    %v1130 = vand.u32 %v1129, 4294901760
    %1131 = vmatpush1.msra.mxu0 %v1130
    %v1132 = vand.u32 %v97, 4294901760
    %v1133 = vsub.f32 %v97, %v1132
    %v1134 = vand.u32 %v1133, 4294901760
    %1135 = vmatprep.subr.mxu0 %v1134
    %v1136 = vand.u32 %v96, 4294901760
    %v1137 = vsub.f32 %v96, %v1136
    %v1138 = vand.u32 %v1137, 4294901760
    %1139 = vmatpush1.msra.mxu0 %v1138
    %v1140 = vand.u32 %v99, 4294901760
    %v1141 = vsub.f32 %v99, %v1140
    %v1142 = vand.u32 %v1141, 4294901760
    %1143 = vmatprep.subr.mxu0 %v1142
    %v1144 = vand.u32 %v98, 4294901760
    %v1145 = vsub.f32 %v98, %v1144
    %v1146 = vand.u32 %v1145, 4294901760
    %1147 = vmatpush1.msra.mxu0 %v1146
    %v1148 = vand.u32 %v101, 4294901760
    %v1149 = vsub.f32 %v101, %v1148
    %v1150 = vand.u32 %v1149, 4294901760
    %1151 = vmatprep.subr.mxu0 %v1150
    %v1152 = vand.u32 %v100, 4294901760
    %v1153 = vsub.f32 %v100, %v1152
    %v1154 = vand.u32 %v1153, 4294901760
    %1155 = vmatpush1.msra.mxu0 %v1154
    %v1156 = vand.u32 %v103, 4294901760
    %v1157 = vsub.f32 %v103, %v1156
    %v1158 = vand.u32 %v1157, 4294901760
    %1159 = vmatprep.subr.mxu0 %v1158
    %v1160 = vand.u32 %v102, 4294901760
    %v1161 = vsub.f32 %v102, %v1160
    %v1162 = vand.u32 %v1161, 4294901760
    %1163 = vmatpush1.msra.mxu0 %v1162
    %v1164 = vand.u32 %v105, 4294901760
    %v1165 = vsub.f32 %v105, %v1164
    %v1166 = vand.u32 %v1165, 4294901760
    %1167 = vmatprep.subr.mxu0 %v1166
    %v1168 = vand.u32 %v104, 4294901760
    %v1169 = vsub.f32 %v104, %v1168
    %v1170 = vand.u32 %v1169, 4294901760
    %1171 = vmatpush1.msra.mxu0 %v1170
    %v1172 = vand.u32 %v107, 4294901760
    %v1173 = vsub.f32 %v107, %v1172
    %v1174 = vand.u32 %v1173, 4294901760
    %1175 = vmatprep.subr.mxu0 %v1174
    %v1176 = vand.u32 %v106, 4294901760
    %v1177 = vsub.f32 %v106, %v1176
    %v1178 = vand.u32 %v1177, 4294901760
    %1179 = vmatpush1.msra.mxu0 %v1178
    %v1180 = vand.u32 %v109, 4294901760
    %v1181 = vsub.f32 %v109, %v1180
    %v1182 = vand.u32 %v1181, 4294901760
    %1183 = vmatprep.subr.mxu0 %v1182
    %v1184 = vand.u32 %v108, 4294901760
    %v1185 = vsub.f32 %v108, %v1184
    %v1186 = vand.u32 %v1185, 4294901760
    %1187 = vmatpush1.msra.mxu0 %v1186
    %v1188 = vand.u32 %v111, 4294901760
    %v1189 = vsub.f32 %v111, %v1188
    %v1190 = vand.u32 %v1189, 4294901760
    %1191 = vmatprep.subr.mxu0 %v1190
    %v1192 = vand.u32 %v110, 4294901760
    %v1193 = vsub.f32 %v110, %v1192
    %v1194 = vand.u32 %v1193, 4294901760
    %1195 = vmatpush1.msra.mxu0 %v1194
    %v1196 = vand.u32 %v113, 4294901760
    %v1197 = vsub.f32 %v113, %v1196
    %v1198 = vand.u32 %v1197, 4294901760
    %1199 = vmatprep.subr.mxu0 %v1198
    %v1200 = vand.u32 %v112, 4294901760
    %v1201 = vsub.f32 %v112, %v1200
    %v1202 = vand.u32 %v1201, 4294901760
    %1203 = vmatpush1.msra.mxu0 %v1202
    %v1204 = vand.u32 %v115, 4294901760
    %v1205 = vsub.f32 %v115, %v1204
    %v1206 = vand.u32 %v1205, 4294901760
    %1207 = vmatprep.subr.mxu0 %v1206
    %v1208 = vand.u32 %v114, 4294901760
    %v1209 = vsub.f32 %v114, %v1208
    %v1210 = vand.u32 %v1209, 4294901760
    %1211 = vmatpush1.msra.mxu0 %v1210
    %v1212 = vand.u32 %v117, 4294901760
    %v1213 = vsub.f32 %v117, %v1212
    %v1214 = vand.u32 %v1213, 4294901760
    %1215 = vmatprep.subr.mxu0 %v1214
    %v1216 = vand.u32 %v116, 4294901760
    %v1217 = vsub.f32 %v116, %v1216
    %v1218 = vand.u32 %v1217, 4294901760
    %1219 = vmatpush1.msra.mxu0 %v1218
    %v1220 = vand.u32 %v119, 4294901760
    %v1221 = vsub.f32 %v119, %v1220
    %v1222 = vand.u32 %v1221, 4294901760
    %1223 = vmatprep.subr.mxu0 %v1222
    %v1224 = vand.u32 %v118, 4294901760
    %v1225 = vsub.f32 %v118, %v1224
    %v1226 = vand.u32 %v1225, 4294901760
    %1227 = vmatpush1.msra.mxu0 %v1226
    %v1228 = vand.u32 %v121, 4294901760
    %v1229 = vsub.f32 %v121, %v1228
    %v1230 = vand.u32 %v1229, 4294901760
    %1231 = vmatprep.subr.mxu0 %v1230
    %v1232 = vand.u32 %v120, 4294901760
    %v1233 = vsub.f32 %v120, %v1232
    %v1234 = vand.u32 %v1233, 4294901760
    %1235 = vmatpush1.msra.mxu0 %v1234
    %v1236 = vand.u32 %v123, 4294901760
    %v1237 = vsub.f32 %v123, %v1236
    %v1238 = vand.u32 %v1237, 4294901760
    %1239 = vmatprep.subr.mxu0 %v1238
    %v1240 = vand.u32 %v122, 4294901760
    %v1241 = vsub.f32 %v122, %v1240
    %v1242 = vand.u32 %v1241, 4294901760
    %1243 = vmatpush1.msra.mxu0 %v1242
    %v1244 = vand.u32 %v125, 4294901760
    %v1245 = vsub.f32 %v125, %v1244
    %v1246 = vand.u32 %v1245, 4294901760
    %1247 = vmatprep.subr.mxu0 %v1246
    %v1248 = vand.u32 %v124, 4294901760
    %v1249 = vsub.f32 %v124, %v1248
    %v1250 = vand.u32 %v1249, 4294901760
    %1251 = vmatpush1.msra.mxu0 %v1250
    %v1252 = vand.u32 %v127, 4294901760
    %v1253 = vsub.f32 %v127, %v1252
    %v1254 = vand.u32 %v1253, 4294901760
    %1255 = vmatprep.subr.mxu0 %v1254
    %v1256 = vand.u32 %v126, 4294901760
    %v1257 = vsub.f32 %v126, %v1256
    %v1258 = vand.u32 %v1257, 4294901760
    %1259 = vmatpush1.msra.mxu0 %v1258
    %v1260 = vand.u32 %v129, 4294901760
    %v1261 = vsub.f32 %v129, %v1260
    %v1262 = vand.u32 %v1261, 4294901760
    %1263 = vmatprep.subr.mxu0 %v1262
    %v1264 = vand.u32 %v128, 4294901760
    %v1265 = vsub.f32 %v128, %v1264
    %v1266 = vand.u32 %v1265, 4294901760
    %1267 = vmatpush1.msra.mxu0 %v1266
    %v1268 = vand.u32 %v65, 4294901760
    %1269 = vmatprep.mubr.f32.mxu0 %v1268
    %v1270 = vand.u32 %v64, 4294901760
    %1271 = vmatmul.mubr.f32.gmra.mrb[0].mxu0 %v1270
    %v1272 = vpop.f32.mrb[0].mxu0
    %v1273 = vadd.f32 %v1008, %v1272
    %v1274 = vpop.f32.mrb[0].mxu0
    %v1275 = vadd.f32 %v1010, %v1274
    %1276 = vdwg.mxu0
    %v1277 = vand.u32 %v67, 4294901760
    %1278 = vmatprep.subr.mxu0 %v1277
    %v1279 = vand.u32 %v66, 4294901760
    %1280 = vmatpush1.msra.mxu0 %v1279
    %v1281 = vand.u32 %v69, 4294901760
    %1282 = vmatprep.subr.mxu0 %v1281
    %v1283 = vand.u32 %v68, 4294901760
    %1284 = vmatpush1.msra.mxu0 %v1283
    %v1285 = vand.u32 %v71, 4294901760
    %1286 = vmatprep.subr.mxu0 %v1285
    %v1287 = vand.u32 %v70, 4294901760
    %1288 = vmatpush1.msra.mxu0 %v1287
    %v1289 = vand.u32 %v73, 4294901760
    %1290 = vmatprep.subr.mxu0 %v1289
    %v1291 = vand.u32 %v72, 4294901760
    %1292 = vmatpush1.msra.mxu0 %v1291
    %v1293 = vand.u32 %v75, 4294901760
    %1294 = vmatprep.subr.mxu0 %v1293
    %v1295 = vand.u32 %v74, 4294901760
    %1296 = vmatpush1.msra.mxu0 %v1295
    %v1297 = vand.u32 %v77, 4294901760
    %1298 = vmatprep.subr.mxu0 %v1297
    %v1299 = vand.u32 %v76, 4294901760
    %1300 = vmatpush1.msra.mxu0 %v1299
    %v1301 = vand.u32 %v79, 4294901760
    %1302 = vmatprep.subr.mxu0 %v1301
    %v1303 = vand.u32 %v78, 4294901760
    %1304 = vmatpush1.msra.mxu0 %v1303
    %v1305 = vand.u32 %v81, 4294901760
    %1306 = vmatprep.subr.mxu0 %v1305
    %v1307 = vand.u32 %v80, 4294901760
    %1308 = vmatpush1.msra.mxu0 %v1307
    %v1309 = vand.u32 %v83, 4294901760
    %1310 = vmatprep.subr.mxu0 %v1309
    %v1311 = vand.u32 %v82, 4294901760
    %1312 = vmatpush1.msra.mxu0 %v1311
    %v1313 = vand.u32 %v85, 4294901760
    %1314 = vmatprep.subr.mxu0 %v1313
    %v1315 = vand.u32 %v84, 4294901760
    %1316 = vmatpush1.msra.mxu0 %v1315
    %v1317 = vand.u32 %v87, 4294901760
    %1318 = vmatprep.subr.mxu0 %v1317
    %v1319 = vand.u32 %v86, 4294901760
    %1320 = vmatpush1.msra.mxu0 %v1319
    %v1321 = vand.u32 %v89, 4294901760
    %1322 = vmatprep.subr.mxu0 %v1321
    %v1323 = vand.u32 %v88, 4294901760
    %1324 = vmatpush1.msra.mxu0 %v1323
    %v1325 = vand.u32 %v91, 4294901760
    %1326 = vmatprep.subr.mxu0 %v1325
    %v1327 = vand.u32 %v90, 4294901760
    %1328 = vmatpush1.msra.mxu0 %v1327
    %v1329 = vand.u32 %v93, 4294901760
    %1330 = vmatprep.subr.mxu0 %v1329
    %v1331 = vand.u32 %v92, 4294901760
    %1332 = vmatpush1.msra.mxu0 %v1331
    %v1333 = vand.u32 %v95, 4294901760
    %1334 = vmatprep.subr.mxu0 %v1333
    %v1335 = vand.u32 %v94, 4294901760
    %1336 = vmatpush1.msra.mxu0 %v1335
    %v1337 = vand.u32 %v97, 4294901760
    %1338 = vmatprep.subr.mxu0 %v1337
    %v1339 = vand.u32 %v96, 4294901760
    %1340 = vmatpush1.msra.mxu0 %v1339
    %v1341 = vand.u32 %v99, 4294901760
    %1342 = vmatprep.subr.mxu0 %v1341
    %v1343 = vand.u32 %v98, 4294901760
    %1344 = vmatpush1.msra.mxu0 %v1343
    %v1345 = vand.u32 %v101, 4294901760
    %1346 = vmatprep.subr.mxu0 %v1345
    %v1347 = vand.u32 %v100, 4294901760
    %1348 = vmatpush1.msra.mxu0 %v1347
    %v1349 = vand.u32 %v103, 4294901760
    %1350 = vmatprep.subr.mxu0 %v1349
    %v1351 = vand.u32 %v102, 4294901760
    %1352 = vmatpush1.msra.mxu0 %v1351
    %v1353 = vand.u32 %v105, 4294901760
    %1354 = vmatprep.subr.mxu0 %v1353
    %v1355 = vand.u32 %v104, 4294901760
    %1356 = vmatpush1.msra.mxu0 %v1355
    %v1357 = vand.u32 %v107, 4294901760
    %1358 = vmatprep.subr.mxu0 %v1357
    %v1359 = vand.u32 %v106, 4294901760
    %1360 = vmatpush1.msra.mxu0 %v1359
    %v1361 = vand.u32 %v109, 4294901760
    %1362 = vmatprep.subr.mxu0 %v1361
    %v1363 = vand.u32 %v108, 4294901760
    %1364 = vmatpush1.msra.mxu0 %v1363
    %v1365 = vand.u32 %v111, 4294901760
    %1366 = vmatprep.subr.mxu0 %v1365
    %v1367 = vand.u32 %v110, 4294901760
    %1368 = vmatpush1.msra.mxu0 %v1367
    %v1369 = vand.u32 %v113, 4294901760
    %1370 = vmatprep.subr.mxu0 %v1369
    %v1371 = vand.u32 %v112, 4294901760
    %1372 = vmatpush1.msra.mxu0 %v1371
    %v1373 = vand.u32 %v115, 4294901760
    %1374 = vmatprep.subr.mxu0 %v1373
    %v1375 = vand.u32 %v114, 4294901760
    %1376 = vmatpush1.msra.mxu0 %v1375
    %v1377 = vand.u32 %v117, 4294901760
    %1378 = vmatprep.subr.mxu0 %v1377
    %v1379 = vand.u32 %v116, 4294901760
    %1380 = vmatpush1.msra.mxu0 %v1379
    %v1381 = vand.u32 %v119, 4294901760
    %1382 = vmatprep.subr.mxu0 %v1381
    %v1383 = vand.u32 %v118, 4294901760
    %1384 = vmatpush1.msra.mxu0 %v1383
    %v1385 = vand.u32 %v121, 4294901760
    %1386 = vmatprep.subr.mxu0 %v1385
    %v1387 = vand.u32 %v120, 4294901760
    %1388 = vmatpush1.msra.mxu0 %v1387
    %v1389 = vand.u32 %v123, 4294901760
    %1390 = vmatprep.subr.mxu0 %v1389
    %v1391 = vand.u32 %v122, 4294901760
    %1392 = vmatpush1.msra.mxu0 %v1391
    %v1393 = vand.u32 %v125, 4294901760
    %1394 = vmatprep.subr.mxu0 %v1393
    %v1395 = vand.u32 %v124, 4294901760
    %1396 = vmatpush1.msra.mxu0 %v1395
    %v1397 = vand.u32 %v127, 4294901760
    %1398 = vmatprep.subr.mxu0 %v1397
    %v1399 = vand.u32 %v126, 4294901760
    %1400 = vmatpush1.msra.mxu0 %v1399
    %v1401 = vand.u32 %v129, 4294901760
    %1402 = vmatprep.subr.mxu0 %v1401
    %v1403 = vand.u32 %v128, 4294901760
    %1404 = vmatpush1.msra.mxu0 %v1403
    %v1405 = vand.u32 %v65, 4294901760
    %1406 = vmatprep.mubr.f32.mxu0 %v1405
    %v1407 = vand.u32 %v64, 4294901760
    %1408 = vmatmul.mubr.f32.gmra.mrb[0].mxu0 %v1407
    %v1409 = vpop.f32.mrb[0].mxu0
    %v1410 = vadd.f32 %v1273, %v1409
    %v1411 = vpop.f32.mrb[0].mxu0
    %v1412 = vadd.f32 %v1275, %v1411
    %1413 = vdwg.mxu0
    %v1414 = vrsqrt.pop %v1410
    %v1415 = vrsqrt.pop %v1412
    %v1416 = vmul.f32 %v62, %v1414
    %v1417 = vmul.f32 %v63, %v1415
    %1418 = vst [vmem:[#allocation9] sm:$0xff] %v1416
    %1419 = vst [vmem:[#allocation9 + $0x8] sm:$0xff] %v1417
    // Predicated region
    $region24: #{tpu_custom_call.1} parent=1 // pred_check
      _
    $region25: #{tpu_custom_call.1} parent=1 // pred_check_branch
      %1421 = sbr.rel (0) target = $region27
    $region26: #{tpu_custom_call.1} parent=1 // pred_region
      %s1423 = ssub.s32 256, 256
      %1424 = vsyncadd [#allocation8], %s1423
      %s1426 = sshll.u32 [#allocation9], 4
      %s1427 = int_to_ptr.vmem [resolvable:$true] %s1426
      %1429 = dma.vmem_to_hbm [thread:$0]  %s1427, 256, %s3, [#allocation8]
    $region27: #{tpu_custom_call.1} parent=1 // pred_fallthru
      _
    // Predicated region
    $region28: #{tpu_custom_call.1} parent=1 // pred_check
      _
    $region29: #{tpu_custom_call.1} parent=1 // pred_check_branch
      %1431 = sbr.rel (0) target = $region31
    $region30: #{tpu_custom_call.1} parent=1 // pred_region
      %1432 = dma.done [#allocation8], 256
    $region31: #{tpu_custom_call.1} parent=1 // pred_fallthru
      _
    %1433 = vsyncpa [#allocation7], 1
    %1434 = vsyncpa [#allocation8], 1
  %1435 = vsyncmov [#allocation3]
  %s1436 = vpop.sfrf %1435
  %p1437 = scmp.eq.s32.totalorder %s1436, 0
  %p1438 = pneg %p1437
  %1440 = shalt.err (%p1438)

</llo_original>
